<compile_context>
chip_gen: v7x
topology: tpu7x:2x2x1
jax: 0.10.0
libtpu: 0.0.40
codegen_flags: <defaults>
</compile_context>

<pallas_src>
import jax
import jax.numpy as jnp
import numpy as np
from jax.experimental import pallas as pl
from jax.experimental.pallas import tpu as pltpu


def fused_core_kernel(xh1_ref, c1_ref, h2_ref, c2_ref,
                      w1_ref, b1_ref, w2_ref, b2_ref, out_ref):
    """Two stacked LSTMCell steps in one kernel.

    Per cell (with gate order already permuted to i,f,o,g in the weights):
        gates = [x|h] @ W_stacked + b_fused
        i,f,o = sigmoid(gates[:, :3H]) ; g = tanh(gates[:, 3H:])
        c' = f*c + i*g ; h' = o * tanh(c')
    """
    H = c1_ref.shape[1]

    def lstm_cell(xh, c, w_ref, b_ref):
        gates = (jnp.dot(xh, w_ref[...], preferred_element_type=jnp.float32)
                 + b_ref[...])
        sig = jax.nn.sigmoid(gates[:, :3 * H])      # i | f | o  (contiguous slab)
        g_g = jnp.tanh(gates[:, 3 * H:])            # g
        i_g = sig[:, 0 * H:1 * H]
        f_g = sig[:, 1 * H:2 * H]
        o_g = sig[:, 2 * H:3 * H]
        c_new = f_g * c + i_g * g_g
        h_new = o_g * jnp.tanh(c_new)
        return h_new, c_new

    # ---- cell 1: input [g_t | h_prev1] was pre-concatenated in the wrapper ----
    xh1 = xh1_ref[...].astype(jnp.float32)
    c1 = c1_ref[...].astype(jnp.float32)
    h1_new, c1_new = lstm_cell(xh1, c1, w1_ref, b1_ref)

    # ---- cell 2: input is [h_t1 | h_prev2], built in-kernel (stays in vregs) ----
    h2 = h2_ref[...].astype(jnp.float32)
    c2 = c2_ref[...].astype(jnp.float32)
    xh2 = jnp.concatenate([h1_new, h2], axis=-1)
    h2_new, c2_new = lstm_cell(xh2, c2, w2_ref, b2_ref)

    # ---- single lane-dense (B, 4H) store: [h1 | c1 | h2 | c2] ----
    out_ref[...] = jnp.concatenate(
        [h1_new, c1_new, h2_new, c2_new], axis=-1).astype(out_ref.dtype)


def init_lstm_params(key, input_size, hidden_size, dtype=jnp.float32):
    """PyTorch-LSTMCell-style init: U(-1/sqrt(H), 1/sqrt(H)).

    Stores both the raw (PyTorch layout) weights (for the reference check) and
    the kernel layout:
      w : (input_size + hidden_size, 4H), columns permuted (i,f,g,o)->(i,f,o,g)
      b : (1, 4H) fused bias, same permutation.
    """
    H = hidden_size
    k = 1.0 / np.sqrt(H)
    k1, k2, k3, k4 = jax.random.split(key, 4)
    w_ih = jax.random.uniform(k1, (4 * H, input_size), dtype, -k, k)
    w_hh = jax.random.uniform(k2, (4 * H, hidden_size), dtype, -k, k)
    b_ih = jax.random.uniform(k3, (4 * H,), dtype, -k, k)
    b_hh = jax.random.uniform(k4, (4 * H,), dtype, -k, k)

    # stack along the K dim and transpose -> (in+H, 4H) for [x|h] @ W
    w_stacked = jnp.concatenate([w_ih, w_hh], axis=1).T
    b_fused = (b_ih + b_hh).reshape(1, 4 * H)

    # permute gate order (i,f,g,o) -> (i,f,o,g) along the 4H axis
    perm = jnp.concatenate([jnp.arange(0, 2 * H),        # i, f
                            jnp.arange(3 * H, 4 * H),    # o
                            jnp.arange(2 * H, 3 * H)])   # g
    w_kernel = w_stacked[:, perm]
    b_kernel = b_fused[:, perm]

    return dict(w=w_kernel, b=b_kernel,
                w_ih=w_ih, w_hh=w_hh, b_ih=b_ih, b_hh=b_hh)


def core_network_forward(params1, params2, g_t, h_prev1, h_prev2,
                         c_prev1, c_prev2):
    """h_t1,c1 = LSTMCell1(g_t,(h1,c1)); h_t2,c2 = LSTMCell2(h_t1,(h2,c2))."""
    B, H = h_prev1.shape
    xh1 = jnp.concatenate([g_t, h_prev1], axis=-1)          # (B, input+H)
    vmem = pl.BlockSpec(memory_space=pltpu.MemorySpace.VMEM)

    packed = pl.pallas_call(
        fused_core_kernel,
        out_shape=jax.ShapeDtypeStruct((B, 4 * H), g_t.dtype),
        in_specs=[vmem] * 8,
        out_specs=vmem,
    )(xh1, c_prev1, h_prev2, c_prev2,
      params1["w"], params1["b"], params2["w"], params2["b"])

    h_t1 = packed[:, 0 * H:1 * H]
    c_t1 = packed[:, 1 * H:2 * H]
    h_t2 = packed[:, 2 * H:3 * H]
    c_t2 = packed[:, 3 * H:4 * H]
    return h_t1, c_t1, h_t2, c_t2


def _ref_lstm_cell(x, h, c, p):
    """Pure-JAX PyTorch-semantics reference (gate order i,f,g,o)."""
    gates = x @ p["w_ih"].T + h @ p["w_hh"].T + p["b_ih"] + p["b_hh"]
    H = h.shape[1]
    i = jax.nn.sigmoid(gates[:, :H])
    f = jax.nn.sigmoid(gates[:, H:2 * H])
    g = jnp.tanh(gates[:, 2 * H:3 * H])
    o = jax.nn.sigmoid(gates[:, 3 * H:])
    c_new = f * c + i * g
    return o * jnp.tanh(c_new), c_new


if __name__ == "__main__":
    input_size = 32
    hidden_size = 32
    B = 2

    key = jax.random.PRNGKey(0)
    kp1, kp2, kg, kh1, kh2, kc1, kc2 = jax.random.split(key, 7)

    params1 = init_lstm_params(kp1, input_size, hidden_size)
    params2 = init_lstm_params(kp2, hidden_size, hidden_size)

    g_t = jax.random.normal(kg, (B, input_size), jnp.float32)
    h_prev1 = jax.random.normal(kh1, (B, hidden_size), jnp.float32)
    h_prev2 = jax.random.normal(kh2, (B, hidden_size), jnp.float32)
    c_prev1 = jax.random.normal(kc1, (B, hidden_size), jnp.float32)
    c_prev2 = jax.random.normal(kc2, (B, hidden_size), jnp.float32)

    outs = core_network_forward(params1, params2, g_t,
                                h_prev1, h_prev2, c_prev1, c_prev2)
    outs = jax.block_until_ready(outs)
    h_t1, c_t1, h_t2, c_t2 = outs

    # pure-JAX reference check (PyTorch LSTMCell semantics)
    rh1, rc1 = _ref_lstm_cell(g_t, h_prev1, c_prev1, params1)
    rh2, rc2 = _ref_lstm_cell(rh1, h_prev2, c_prev2, params2)
    np.testing.assert_allclose(np.asarray(h_t1), np.asarray(rh1), atol=1e-5, rtol=1e-5)
    np.testing.assert_allclose(np.asarray(c_t1), np.asarray(rc1), atol=1e-5, rtol=1e-5)
    np.testing.assert_allclose(np.asarray(h_t2), np.asarray(rh2), atol=1e-5, rtol=1e-5)
    np.testing.assert_allclose(np.asarray(c_t2), np.asarray(rc2), atol=1e-5, rtol=1e-5)

    print("KERNEL_OK")
</pallas_src>

<mosaic_0001>
module attributes {stable_mosaic.version = 11 : i64} {
  func.func @fused_core_kernel(%arg0: memref<2x64xf32, #tpu.memory_space<vmem>>, %arg1: memref<2x32xf32, #tpu.memory_space<vmem>>, %arg2: memref<2x32xf32, #tpu.memory_space<vmem>>, %arg3: memref<2x32xf32, #tpu.memory_space<vmem>>, %arg4: memref<64x128xf32, #tpu.memory_space<vmem>>, %arg5: memref<1x128xf32, #tpu.memory_space<vmem>>, %arg6: memref<64x128xf32, #tpu.memory_space<vmem>>, %arg7: memref<1x128xf32, #tpu.memory_space<vmem>>, %arg8: memref<2x128xf32, #tpu.memory_space<vmem>>) attributes {dimension_semantics = [], scalar_prefetch = 0 : i64, scratch_operands = 0 : i64, tpu.core_type = #tpu.core_type<tc>} {
    %c0 = arith.constant 0 : index
    %c0_0 = arith.constant 0 : index
    %0 = vector.load %arg0[%c0, %c0_0] : memref<2x64xf32, #tpu.memory_space<vmem>>, vector<2x64xf32>
    %c0_1 = arith.constant 0 : index
    %c0_2 = arith.constant 0 : index
    %1 = vector.load %arg1[%c0_1, %c0_2] : memref<2x32xf32, #tpu.memory_space<vmem>>, vector<2x32xf32>
    %c0_3 = arith.constant 0 : index
    %c0_4 = arith.constant 0 : index
    %2 = vector.load %arg4[%c0_3, %c0_4] : memref<64x128xf32, #tpu.memory_space<vmem>>, vector<64x128xf32>
    %cst = arith.constant dense<0.000000e+00> : vector<2x128xf32>
    %3 = tpu.matmul %0, %2, %cst {dimension_numbers = #tpu.dot_dimension_numbers<[1], [0], [0], [1], [0, 0, 1, 1], [], []>} : vector<2x64xf32>, vector<64x128xf32>, vector<2x128xf32> -> vector<2x128xf32>
    %c0_5 = arith.constant 0 : index
    %c0_6 = arith.constant 0 : index
    %4 = vector.load %arg5[%c0_5, %c0_6] : memref<1x128xf32, #tpu.memory_space<vmem>>, vector<1x128xf32>
    %5 = vector.broadcast %4 : vector<1x128xf32> to vector<2x128xf32>
    %6 = arith.addf %3, %5 : vector<2x128xf32>
    %7 = vector.extract_strided_slice %6 {offsets = [0, 0], sizes = [2, 96], strides = [1, 1]} : vector<2x128xf32> to vector<2x96xf32>
    %8 = arith.negf %7 : vector<2x96xf32>
    %9 = math.exp %8 : vector<2x96xf32>
    %cst_7 = arith.constant 1.000000e+00 : f32
    %10 = vector.broadcast %cst_7 : f32 to vector<2x96xf32>
    %11 = arith.addf %10, %9 : vector<2x96xf32>
    %12 = arith.divf %10, %11 : vector<2x96xf32>
    %13 = vector.extract_strided_slice %6 {offsets = [0, 96], sizes = [2, 32], strides = [1, 1]} : vector<2x128xf32> to vector<2x32xf32>
    %14 = math.tanh %13 : vector<2x32xf32>
    %15 = vector.extract_strided_slice %12 {offsets = [0, 0], sizes = [2, 32], strides = [1, 1]} : vector<2x96xf32> to vector<2x32xf32>
    %16 = vector.extract_strided_slice %12 {offsets = [0, 32], sizes = [2, 32], strides = [1, 1]} : vector<2x96xf32> to vector<2x32xf32>
    %17 = vector.extract_strided_slice %12 {offsets = [0, 64], sizes = [2, 32], strides = [1, 1]} : vector<2x96xf32> to vector<2x32xf32>
    %18 = arith.mulf %16, %1 : vector<2x32xf32>
    %19 = arith.mulf %15, %14 : vector<2x32xf32>
    %20 = arith.addf %18, %19 : vector<2x32xf32>
    %21 = math.tanh %20 : vector<2x32xf32>
    %22 = arith.mulf %17, %21 : vector<2x32xf32>
    %c0_8 = arith.constant 0 : index
    %c0_9 = arith.constant 0 : index
    %23 = vector.load %arg2[%c0_8, %c0_9] : memref<2x32xf32, #tpu.memory_space<vmem>>, vector<2x32xf32>
    %c0_10 = arith.constant 0 : index
    %c0_11 = arith.constant 0 : index
    %24 = vector.load %arg3[%c0_10, %c0_11] : memref<2x32xf32, #tpu.memory_space<vmem>>, vector<2x32xf32>
    %25 = tpu.concatenate %22, %23 in 1 : vector<2x32xf32>, vector<2x32xf32> -> vector<2x64xf32>
    %c0_12 = arith.constant 0 : index
    %c0_13 = arith.constant 0 : index
    %26 = vector.load %arg6[%c0_12, %c0_13] : memref<64x128xf32, #tpu.memory_space<vmem>>, vector<64x128xf32>
    %cst_14 = arith.constant dense<0.000000e+00> : vector<2x128xf32>
    %27 = tpu.matmul %25, %26, %cst_14 {dimension_numbers = #tpu.dot_dimension_numbers<[1], [0], [0], [1], [0, 0, 1, 1], [], []>} : vector<2x64xf32>, vector<64x128xf32>, vector<2x128xf32> -> vector<2x128xf32>
    %c0_15 = arith.constant 0 : index
    %c0_16 = arith.constant 0 : index
    %28 = vector.load %arg7[%c0_15, %c0_16] : memref<1x128xf32, #tpu.memory_space<vmem>>, vector<1x128xf32>
    %29 = vector.broadcast %28 : vector<1x128xf32> to vector<2x128xf32>
    %30 = arith.addf %27, %29 : vector<2x128xf32>
    %31 = vector.extract_strided_slice %30 {offsets = [0, 0], sizes = [2, 96], strides = [1, 1]} : vector<2x128xf32> to vector<2x96xf32>
    %32 = arith.negf %31 : vector<2x96xf32>
    %33 = math.exp %32 : vector<2x96xf32>
    %cst_17 = arith.constant 1.000000e+00 : f32
    %34 = vector.broadcast %cst_17 : f32 to vector<2x96xf32>
    %35 = arith.addf %34, %33 : vector<2x96xf32>
    %36 = arith.divf %34, %35 : vector<2x96xf32>
    %37 = vector.extract_strided_slice %30 {offsets = [0, 96], sizes = [2, 32], strides = [1, 1]} : vector<2x128xf32> to vector<2x32xf32>
    %38 = math.tanh %37 : vector<2x32xf32>
    %39 = vector.extract_strided_slice %36 {offsets = [0, 0], sizes = [2, 32], strides = [1, 1]} : vector<2x96xf32> to vector<2x32xf32>
    %40 = vector.extract_strided_slice %36 {offsets = [0, 32], sizes = [2, 32], strides = [1, 1]} : vector<2x96xf32> to vector<2x32xf32>
    %41 = vector.extract_strided_slice %36 {offsets = [0, 64], sizes = [2, 32], strides = [1, 1]} : vector<2x96xf32> to vector<2x32xf32>
    %42 = arith.mulf %40, %24 : vector<2x32xf32>
    %43 = arith.mulf %39, %38 : vector<2x32xf32>
    %44 = arith.addf %42, %43 : vector<2x32xf32>
    %45 = math.tanh %44 : vector<2x32xf32>
    %46 = arith.mulf %41, %45 : vector<2x32xf32>
    %47 = tpu.concatenate %22, %20, %46, %44 in 1 : vector<2x32xf32>, vector<2x32xf32>, vector<2x32xf32>, vector<2x32xf32> -> vector<2x128xf32>
    %c0_18 = arith.constant 0 : index
    %c0_19 = arith.constant 0 : index
    %48 = vector.load %arg8[%c0_18, %c0_19] : memref<2x128xf32, #tpu.memory_space<vmem>>, vector<2x128xf32>
    tpu.vector_store %arg8[%c0_18, %c0_19], %47 {strides = array<i32>} : memref<2x128xf32, #tpu.memory_space<vmem>>, vector<2x128xf32>,
    return
  }
}

</mosaic_0001>

<llo_original>
// kernel: tpu_custom_call.1
$region0: #{tpu_custom_call.1}
  #allocation0 [shape = 'u32[]', space=smem, size = 0x4, offset = 0x4, fixed_abs, tag = 'smem constant byte address 0x4 - core index']
  #allocation1 [shape = 'u32[144,128]{1,0:T(1,128)}', space=vmem, size = 0x12000, scoped, tag = 'internal scratch']
  %s0 = inlined_call_operand.hbm [shape: f32[2,64], index: 0, kind: input, shape index: {}]
  %s1 = inlined_call_operand.vmem [shape: f32[2,32], index: 1, kind: input, shape index: {}]
  %s2 = inlined_call_operand.vmem [shape: f32[2,32], index: 2, kind: input, shape index: {}]
  %s3 = inlined_call_operand.vmem [shape: f32[2,32], index: 3, kind: input, shape index: {}]
  %s4 = inlined_call_operand.hbm [shape: f32[64,128], index: 4, kind: input, shape index: {}]
  %s5 = inlined_call_operand.vmem [shape: f32[1,128], index: 5, kind: input, shape index: {}]
  %s6 = inlined_call_operand.hbm [shape: f32[64,128], index: 6, kind: input, shape index: {}]
  %s7 = inlined_call_operand.vmem [shape: f32[1,128], index: 7, kind: input, shape index: {}]
  %s8 = inlined_call_operand.hbm [shape: f32[2,128], index: 8, kind: output, shape index: {}]
  %s9 = sld [smem:[#allocation0]]
  $region54: #{tpu_custom_call.1} parent=0
    _
  %s11 = ssub.s32 1, %s9
  %s12 = scalar_select 0, %s11, %s9
  $region1: #{tpu_custom_call.1} parent=0
    #allocation2 [shape = 'u8[1024]{0}', space=vmem, size = 0x400, scoped, tag = 'input window, operand 0, single buffered']
    #allocation3 [shape = 's32[1]{0}', space=sflag, size = 0x4, scoped, tag = 'scoped memory for tpu_custom_call.1']
    #allocation4 [shape = 's32[1]{0}', space=sflag, size = 0x4, scoped, tag = 'scoped memory for tpu_custom_call.1']
    #allocation5 [shape = 'u8[32768]{0}', space=vmem, size = 0x8000, scoped, tag = 'input window, operand 4, single buffered']
    #allocation6 [shape = 's32[1]{0}', space=sflag, size = 0x4, scoped, tag = 'scoped memory for tpu_custom_call.1']
    #allocation7 [shape = 'u8[32768]{0}', space=vmem, size = 0x8000, scoped, tag = 'input window, operand 6, single buffered']
    #allocation8 [shape = 'u8[1024]{0}', space=vmem, size = 0x400, scoped, tag = 'output window, operand 0, single buffered']
    %13 = vsyncpa [#allocation3], 0
    %14 = vsyncpa [#allocation6], 0
    %15 = vsyncpa [#allocation4], 0
    // Predicated region
    $region2: #{tpu_custom_call.1} parent=1 // pred_check
      _
    $region3: #{tpu_custom_call.1} parent=1 // pred_check_branch
      %17 = sbr.rel (0) target = $region5
    $region4: #{tpu_custom_call.1} parent=1 // pred_region
      %s19 = ssub.s32 32, 32
      %20 = vsyncadd [#allocation3], %s19
      %s22 = sshll.u32 [#allocation2], 4
      %s23 = int_to_ptr.vmem [resolvable:$true] %s22
      %25 = dma.hbm_to_vmem [thread:$0]  %s0, 32, %s23, [#allocation3]
    $region5: #{tpu_custom_call.1} parent=1 // pred_fallthru
      _
    // Predicated region
    $region6: #{tpu_custom_call.1} parent=1 // pred_check
      _
    $region7: #{tpu_custom_call.1} parent=1 // pred_check_branch
      %27 = sbr.rel (0) target = $region9
    $region8: #{tpu_custom_call.1} parent=1 // pred_region
      _
    $region9: #{tpu_custom_call.1} parent=1 // pred_fallthru
      _
    // Predicated region
    $region10: #{tpu_custom_call.1} parent=1 // pred_check
      _
    $region11: #{tpu_custom_call.1} parent=1 // pred_check_branch
      %29 = sbr.rel (0) target = $region13
    $region12: #{tpu_custom_call.1} parent=1 // pred_region
      _
    $region13: #{tpu_custom_call.1} parent=1 // pred_fallthru
      _
    // Predicated region
    $region14: #{tpu_custom_call.1} parent=1 // pred_check
      _
    $region15: #{tpu_custom_call.1} parent=1 // pred_check_branch
      %31 = sbr.rel (0) target = $region17
    $region16: #{tpu_custom_call.1} parent=1 // pred_region
      _
    $region17: #{tpu_custom_call.1} parent=1 // pred_fallthru
      _
    // Predicated region
    $region18: #{tpu_custom_call.1} parent=1 // pred_check
      _
    $region19: #{tpu_custom_call.1} parent=1 // pred_check_branch
      %33 = sbr.rel (0) target = $region21
    $region20: #{tpu_custom_call.1} parent=1 // pred_region
      %s35 = ssub.s32 1024, 1024
      %36 = vsyncadd [#allocation6], %s35
      %s37 = sshll.u32 [#allocation5], 4
      %s38 = int_to_ptr.vmem [resolvable:$true] %s37
      %43 = dma.hbm_to_vmem [thread:$0]  %s4, 1024, %s38, [#allocation6], 128, 128, 8
    $region21: #{tpu_custom_call.1} parent=1 // pred_fallthru
      _
    // Predicated region
    $region22: #{tpu_custom_call.1} parent=1 // pred_check
      _
    $region23: #{tpu_custom_call.1} parent=1 // pred_check_branch
      %45 = sbr.rel (0) target = $region25
    $region24: #{tpu_custom_call.1} parent=1 // pred_region
      _
    $region25: #{tpu_custom_call.1} parent=1 // pred_fallthru
      _
    // Predicated region
    $region26: #{tpu_custom_call.1} parent=1 // pred_check
      _
    $region27: #{tpu_custom_call.1} parent=1 // pred_check_branch
      %47 = sbr.rel (0) target = $region29
    $region28: #{tpu_custom_call.1} parent=1 // pred_region
      %s49 = ssub.s32 1024, 1024
      %50 = vsyncadd [#allocation6], %s49
      %s51 = sshll.u32 [#allocation7], 4
      %s52 = int_to_ptr.vmem [resolvable:$true] %s51
      %57 = dma.hbm_to_vmem [thread:$0]  %s6, 1024, %s52, [#allocation6], 128, 128, 8
    $region29: #{tpu_custom_call.1} parent=1 // pred_fallthru
      _
    // Predicated region
    $region30: #{tpu_custom_call.1} parent=1 // pred_check
      _
    $region31: #{tpu_custom_call.1} parent=1 // pred_check_branch
      %59 = sbr.rel (0) target = $region33
    $region32: #{tpu_custom_call.1} parent=1 // pred_region
      _
    $region33: #{tpu_custom_call.1} parent=1 // pred_fallthru
      _
    // Predicated region
    $region34: #{tpu_custom_call.1} parent=1 // pred_check
      _
    $region35: #{tpu_custom_call.1} parent=1 // pred_check_branch
      %61 = sbr.rel (0) target = $region37
    $region36: #{tpu_custom_call.1} parent=1 // pred_region
      %62 = dma.done [#allocation3], 32
    $region37: #{tpu_custom_call.1} parent=1 // pred_fallthru
      _
    // Predicated region
    $region38: #{tpu_custom_call.1} parent=1 // pred_check
      _
    $region39: #{tpu_custom_call.1} parent=1 // pred_check_branch
      %64 = sbr.rel (0) target = $region41
    $region40: #{tpu_custom_call.1} parent=1 // pred_region
      %65 = dma.done [#allocation6], 1024
    $region41: #{tpu_custom_call.1} parent=1 // pred_fallthru
      _
    // Predicated region
    $region42: #{tpu_custom_call.1} parent=1 // pred_check
      _
    $region43: #{tpu_custom_call.1} parent=1 // pred_check_branch
      %67 = sbr.rel (0) target = $region45
    $region44: #{tpu_custom_call.1} parent=1 // pred_region
      %68 = dma.done [#allocation6], 1024
    $region45: #{tpu_custom_call.1} parent=1 // pred_fallthru
      _
    %v69 = vld [vmem:[#allocation2] sm:$0x3]
    %v70 = vld [vmem:[%s1] sm:$0x3]
    %v71 = vld [vmem:[#allocation5] sm:$0xff]
    %v72 = vld [vmem:[#allocation5 + $0x8] sm:$0xff]
    %v73 = vld [vmem:[#allocation5 + $0x10] sm:$0xff]
    %v74 = vld [vmem:[#allocation5 + $0x18] sm:$0xff]
    %v75 = vld [vmem:[#allocation5 + $0x20] sm:$0xff]
    %v76 = vld [vmem:[#allocation5 + $0x28] sm:$0xff]
    %v77 = vld [vmem:[#allocation5 + $0x30] sm:$0xff]
    %v78 = vld [vmem:[#allocation5 + $0x38] sm:$0xff]
    %v79 = vld [vmem:[%s5] sm:$0x1]
    %v81 = vlaneseq
    %v82 = vshrl.u32 %v81, 7
    %v83 = vsub.s32 0, %v82
    %v84 = vrot.slane %v79, %v83
    %vm86 = vcmask 523264
    %v88 = vsel %vm86, %v69, 0
    %90 = vmatprep.subr.mxu0 0.0
    %91 = vmatpush1.msra.mxu0 %v71
    %92 = vmatprep.subr.mxu0 0.0
    %93 = vmatpush1.msra.mxu0 %v72
    %94 = vmatprep.subr.mxu0 0.0
    %95 = vmatpush1.msra.mxu0 %v73
    %96 = vmatprep.subr.mxu0 0.0
    %97 = vmatpush1.msra.mxu0 %v74
    %98 = vmatprep.subr.mxu0 0.0
    %99 = vmatpush1.msra.mxu0 %v75
    %100 = vmatprep.subr.mxu0 0.0
    %101 = vmatpush1.msra.mxu0 %v76
    %102 = vmatprep.subr.mxu0 0.0
    %103 = vmatpush1.msra.mxu0 %v77
    %104 = vmatprep.subr.mxu0 0.0
    %105 = vmatpush1.msra.mxu0 %v78
    %106 = vmatprep.subr.mxu0 0.0
    %107 = vmatpush1.msra.mxu0 0.0
    %108 = vmatprep.subr.mxu0 0.0
    %109 = vmatpush1.msra.mxu0 0.0
    %110 = vmatprep.subr.mxu0 0.0
    %111 = vmatpush1.msra.mxu0 0.0
    %112 = vmatprep.subr.mxu0 0.0
    %113 = vmatpush1.msra.mxu0 0.0
    %114 = vmatprep.subr.mxu0 0.0
    %115 = vmatpush1.msra.mxu0 0.0
    %116 = vmatprep.subr.mxu0 0.0
    %117 = vmatpush1.msra.mxu0 0.0
    %118 = vmatprep.subr.mxu0 0.0
    %119 = vmatpush1.msra.mxu0 0.0
    %120 = vmatprep.subr.mxu0 0.0
    %121 = vmatpush1.msra.mxu0 0.0
    %122 = vmatprep.subr.mxu0 0.0
    %123 = vmatpush1.msra.mxu0 0.0
    %124 = vmatprep.subr.mxu0 0.0
    %125 = vmatpush1.msra.mxu0 0.0
    %126 = vmatprep.subr.mxu0 0.0
    %127 = vmatpush1.msra.mxu0 0.0
    %128 = vmatprep.subr.mxu0 0.0
    %129 = vmatpush1.msra.mxu0 0.0
    %130 = vmatprep.subr.mxu0 0.0
    %131 = vmatpush1.msra.mxu0 0.0
    %132 = vmatprep.subr.mxu0 0.0
    %133 = vmatpush1.msra.mxu0 0.0
    %134 = vmatprep.subr.mxu0 0.0
    %135 = vmatpush1.msra.mxu0 0.0
    %136 = vmatprep.subr.mxu0 0.0
    %137 = vmatpush1.msra.mxu0 0.0
    %138 = vmatprep.subr.mxu0 0.0
    %139 = vmatpush1.msra.mxu0 0.0
    %140 = vmatprep.subr.mxu0 0.0
    %141 = vmatpush1.msra.mxu0 0.0
    %142 = vmatprep.subr.mxu0 0.0
    %143 = vmatpush1.msra.mxu0 0.0
    %144 = vmatprep.subr.mxu0 0.0
    %145 = vmatpush1.msra.mxu0 0.0
    %146 = vmatprep.subr.mxu0 0.0
    %147 = vmatpush1.msra.mxu0 0.0
    %148 = vmatprep.subr.mxu0 0.0
    %149 = vmatpush1.msra.mxu0 0.0
    %150 = vmatprep.subr.mxu0 0.0
    %151 = vmatpush1.msra.mxu0 0.0
    %152 = vmatprep.subr.mxu0 0.0
    %153 = vmatpush1.msra.mxu0 0.0
    %154 = vmatprep.mubr.f32.mxu0 0.0
    %155 = vmatmul.mubr.f32.gmra.mrb[0].mxu0 %v88
    %v156 = vpop.f32.mrb[0].mxu0
    %v157 = vadd.f32 %v84, %v156
    %v158 = vpop.f32.mrb[0].mxu0
    %159 = vdwg.mxu0
    %v160 = vxor.u32 %v157, 2147483648
    %v161 = vmul.f32 %v160, 1.442695
    %v162 = vpow.pop %v161
    %v163 = vadd.f32 %v162, 1.0
    %v164 = vrcp.pop %v163
    %v165 = vmul.f32 1.0, %v164
    %v166 = vtanh.pop %v157
    %168 = vrot.lane.b32.xlu0 %v70, 32
    %v169 = vpop.permute.xlu0 %168
    %v171 = vmul.f32 %v165, %v169
    %173 = vrot.lane.b32.xlu0 %v166, 32
    %v174 = vpop.permute.xlu0 %173
    %v176 = vmul.f32 %v165, %v174
    %178 = vrot.lane.b32.xlu0 %v176, 32
    %v179 = vpop.permute.xlu0 %178
    %v181 = vadd.f32 %v171, %v179
    %v182 = vtanh.pop %v181
    %184 = vrot.lane.b32.xlu0 %v182, 32
    %v185 = vpop.permute.xlu0 %184
    %v187 = vmul.f32 %v165, %v185
    %v188 = vld [vmem:[%s2] sm:$0x3]
    %v189 = vld [vmem:[%s3] sm:$0x3]
    %191 = vrot.lane.b32.xlu0 %v187, 64
    %v192 = vpop.permute.xlu0 %191
    %195 = vrot.lane.b32.xlu0 %v188, 32
    %v196 = vpop.permute.xlu0 %195
    %vm198 = vcmask 261120
    %v199 = vsel %vm198, %v192, %v196
    %v200 = vld [vmem:[#allocation7] sm:$0xff]
    %v201 = vld [vmem:[#allocation7 + $0x8] sm:$0xff]
    %v202 = vld [vmem:[#allocation7 + $0x10] sm:$0xff]
    %v203 = vld [vmem:[#allocation7 + $0x18] sm:$0xff]
    %v204 = vld [vmem:[#allocation7 + $0x20] sm:$0xff]
    %v205 = vld [vmem:[#allocation7 + $0x28] sm:$0xff]
    %v206 = vld [vmem:[#allocation7 + $0x30] sm:$0xff]
    %v207 = vld [vmem:[#allocation7 + $0x38] sm:$0xff]
    %v208 = vld [vmem:[%s7] sm:$0x1]
    %v210 = vlaneseq
    %v211 = vshrl.u32 %v210, 7
    %v212 = vsub.s32 0, %v211
    %v213 = vrot.slane %v208, %v212
    %v216 = vsel %vm86, %v199, 0
    %218 = vmatprep.subr.mxu0 0.0
    %219 = vmatpush1.msra.mxu0 %v200
    %220 = vmatprep.subr.mxu0 0.0
    %221 = vmatpush1.msra.mxu0 %v201
    %222 = vmatprep.subr.mxu0 0.0
    %223 = vmatpush1.msra.mxu0 %v202
    %224 = vmatprep.subr.mxu0 0.0
    %225 = vmatpush1.msra.mxu0 %v203
    %226 = vmatprep.subr.mxu0 0.0
    %227 = vmatpush1.msra.mxu0 %v204
    %228 = vmatprep.subr.mxu0 0.0
    %229 = vmatpush1.msra.mxu0 %v205
    %230 = vmatprep.subr.mxu0 0.0
    %231 = vmatpush1.msra.mxu0 %v206
    %232 = vmatprep.subr.mxu0 0.0
    %233 = vmatpush1.msra.mxu0 %v207
    %234 = vmatprep.subr.mxu0 0.0
    %235 = vmatpush1.msra.mxu0 0.0
    %236 = vmatprep.subr.mxu0 0.0
    %237 = vmatpush1.msra.mxu0 0.0
    %238 = vmatprep.subr.mxu0 0.0
    %239 = vmatpush1.msra.mxu0 0.0
    %240 = vmatprep.subr.mxu0 0.0
    %241 = vmatpush1.msra.mxu0 0.0
    %242 = vmatprep.subr.mxu0 0.0
    %243 = vmatpush1.msra.mxu0 0.0
    %244 = vmatprep.subr.mxu0 0.0
    %245 = vmatpush1.msra.mxu0 0.0
    %246 = vmatprep.subr.mxu0 0.0
    %247 = vmatpush1.msra.mxu0 0.0
    %248 = vmatprep.subr.mxu0 0.0
    %249 = vmatpush1.msra.mxu0 0.0
    %250 = vmatprep.subr.mxu0 0.0
    %251 = vmatpush1.msra.mxu0 0.0
    %252 = vmatprep.subr.mxu0 0.0
    %253 = vmatpush1.msra.mxu0 0.0
    %254 = vmatprep.subr.mxu0 0.0
    %255 = vmatpush1.msra.mxu0 0.0
    %256 = vmatprep.subr.mxu0 0.0
    %257 = vmatpush1.msra.mxu0 0.0
    %258 = vmatprep.subr.mxu0 0.0
    %259 = vmatpush1.msra.mxu0 0.0
    %260 = vmatprep.subr.mxu0 0.0
    %261 = vmatpush1.msra.mxu0 0.0
    %262 = vmatprep.subr.mxu0 0.0
    %263 = vmatpush1.msra.mxu0 0.0
    %264 = vmatprep.subr.mxu0 0.0
    %265 = vmatpush1.msra.mxu0 0.0
    %266 = vmatprep.subr.mxu0 0.0
    %267 = vmatpush1.msra.mxu0 0.0
    %268 = vmatprep.subr.mxu0 0.0
    %269 = vmatpush1.msra.mxu0 0.0
    %270 = vmatprep.subr.mxu0 0.0
    %271 = vmatpush1.msra.mxu0 0.0
    %272 = vmatprep.subr.mxu0 0.0
    %273 = vmatpush1.msra.mxu0 0.0
    %274 = vmatprep.subr.mxu0 0.0
    %275 = vmatpush1.msra.mxu0 0.0
    %276 = vmatprep.subr.mxu0 0.0
    %277 = vmatpush1.msra.mxu0 0.0
    %278 = vmatprep.subr.mxu0 0.0
    %279 = vmatpush1.msra.mxu0 0.0
    %280 = vmatprep.subr.mxu0 0.0
    %281 = vmatpush1.msra.mxu0 0.0
    %282 = vmatprep.mubr.f32.mxu0 0.0
    %283 = vmatmul.mubr.f32.gmra.mrb[0].mxu0 %v216
    %v284 = vpop.f32.mrb[0].mxu0
    %v285 = vadd.f32 %v213, %v284
    %v286 = vpop.f32.mrb[0].mxu0
    %287 = vdwg.mxu0
    %v288 = vxor.u32 %v285, 2147483648
    %v289 = vmul.f32 %v288, 1.442695
    %v290 = vpow.pop %v289
    %v291 = vadd.f32 %v290, 1.0
    %v292 = vrcp.pop %v291
    %v293 = vmul.f32 1.0, %v292
    %v294 = vtanh.pop %v285
    %296 = vrot.lane.b32.xlu0 %v189, 32
    %v297 = vpop.permute.xlu0 %296
    %v299 = vmul.f32 %v293, %v297
    %301 = vrot.lane.b32.xlu0 %v294, 32
    %v302 = vpop.permute.xlu0 %301
    %v304 = vmul.f32 %v293, %v302
    %306 = vrot.lane.b32.xlu0 %v304, 32
    %v307 = vpop.permute.xlu0 %306
    %v309 = vadd.f32 %v299, %v307
    %v310 = vtanh.pop %v309
    %312 = vrot.lane.b32.xlu0 %v310, 32
    %v313 = vpop.permute.xlu0 %312
    %v315 = vmul.f32 %v293, %v313
    %317 = vrot.lane.b32.xlu0 %v309, 64
    %v318 = vpop.permute.xlu0 %317
    %v320 = vsel %vm198, %v192, %v181
    %v321 = vsel %vm86, %v320, %v315
    %vm322 = vcmask 785408
    %v323 = vsel %vm322, %v321, %v318
    %324 = vst [vmem:[#allocation8] sm:$0x3] %v323
    // Predicated region
    $region46: #{tpu_custom_call.1} parent=1 // pred_check
      _
    $region47: #{tpu_custom_call.1} parent=1 // pred_check_branch
      %326 = sbr.rel (0) target = $region49
    $region48: #{tpu_custom_call.1} parent=1 // pred_region
      %s328 = ssub.s32 32, 32
      %329 = vsyncadd [#allocation4], %s328
      %s331 = sshll.u32 [#allocation8], 4
      %s332 = int_to_ptr.vmem [resolvable:$true] %s331
      %334 = dma.vmem_to_hbm [thread:$0]  %s332, 32, %s8, [#allocation4]
    $region49: #{tpu_custom_call.1} parent=1 // pred_fallthru
      _
    // Predicated region
    $region50: #{tpu_custom_call.1} parent=1 // pred_check
      _
    $region51: #{tpu_custom_call.1} parent=1 // pred_check_branch
      %336 = sbr.rel (0) target = $region53
    $region52: #{tpu_custom_call.1} parent=1 // pred_region
      %337 = dma.done [#allocation4], 32
    $region53: #{tpu_custom_call.1} parent=1 // pred_fallthru
      _
    %338 = vsyncpa [#allocation3], 1
    %339 = vsyncpa [#allocation6], 1
    %340 = vsyncpa [#allocation4], 1

</llo_original>
